<compile_context>
chip_gen: v7x
topology: tpu7x:2x2x1
jax: 0.10.0
libtpu: 0.0.40
codegen_flags: <defaults>
</compile_context>

<pallas_src>
import jax
import jax.numpy as jnp
from jax import lax
from jax.experimental import pallas as pl
from jax.experimental.pallas import tpu as pltpu


def _round_up(a: int, b: int) -> int:
    return ((a + b - 1) // b) * b


def _vmem_budget_bytes() -> int:
    """Per-TensorCore VMEM budget with headroom (generation-aware)."""
    cap = 64 << 20  # conservative default = v7x per-TC VMEM
    try:
        cap = int(pltpu.get_tpu_info().vmem_capacity_bytes)
    except Exception:
        pass
    return max(cap - (8 << 20), 16 << 20)


def build_position_encoding_table(vocab_size: int, model_dim: int) -> jnp.ndarray:
    """Deterministic construction of the frozen sinusoidal table (float32)."""
    pos = jnp.arange(vocab_size, dtype=jnp.float32)[:, None]           # (V, 1)
    _2i = jnp.arange(0, model_dim, 2, dtype=jnp.float32)[None, :]      # (1, ceil(D/2))
    angle = pos / (float(vocab_size) ** (_2i / float(model_dim)))      # (V, ceil(D/2))
    table = jnp.zeros((vocab_size, model_dim), dtype=jnp.float32)
    table = table.at[:, 0::2].set(jnp.sin(angle))
    # Slice angle so odd model_dim also works (cos half has floor(D/2) columns).
    table = table.at[:, 1::2].set(jnp.cos(angle[:, : model_dim // 2]))
    return table


def _onehot_gather_kernel(idx_ref, table_ref, out_ref):
    """Small-vocab gather as a one-hot MXU matmul.

    idx_ref   : VMEM (tb, 1)  int32   -- token-block indices
    table_ref : VMEM (Vp, td) float32 -- column block of the (padded) table
    out_ref   : VMEM (tb, td) float32 -- lane-dense output block
    """
    tb = out_ref.shape[0]
    vp = table_ref.shape[0]
    ids = idx_ref[...]                                        # (tb, 1)
    iota = lax.broadcasted_iota(jnp.int32, (tb, vp), 1)       # (tb, Vp)
    one_hot = (iota == ids).astype(table_ref.dtype)           # lane-broadcast compare
    out_ref[...] = jnp.dot(
        one_hot, table_ref[...], preferred_element_type=jnp.float32
    ).astype(out_ref.dtype)


def _row_gather_kernel(idx_ref, table_ref, out_ref):
    """Large-vocab fallback: unrolled scalar-indexed row gather.

    idx_ref   : SMEM (n_pad,) int32   -- scalar-prefetched flat indices
    table_ref : VMEM (Vp, td) float32 -- column block of the (padded) table
    out_ref   : VMEM (tb, td) float32
    """
    tb = out_ref.shape[0]
    base = pl.program_id(0) * tb

    def body(j, carry):
        row = idx_ref[base + j]             # cheap SMEM scalar read
        out_ref[j, :] = table_ref[row, :]   # lane-dense row copy (D padded to 128)
        return carry

    # unroll=8 lets index reads / row loads / row stores from different
    # iterations co-issue across VLIW slots instead of serializing.
    lax.fori_loop(0, tb, body, 0, unroll=8)


def position_encoding_lookup(table: jnp.ndarray, x: jnp.ndarray,
                             *, block_tokens: int = 1024) -> jnp.ndarray:
    """Embedding lookup: out = table[x], x is any-shaped integer array."""
    V, D = table.shape

    # Clamp so padded / out-of-range indices can never drive an OOB VMEM read.
    # (PyTorch would error on OOB tokens; we clamp instead.)
    flat_idx = jnp.clip(x.reshape(-1).astype(jnp.int32), 0, V - 1)
    n = int(flat_idx.shape[0])

    use_onehot = V <= 1024
    vp = _round_up(V, 128) if use_onehot else _round_up(V, 8)
    dp = _round_up(D, 128)

    budget = _vmem_budget_bytes()

    # Column block td (multiple of 128): keep <= ~half the budget for the
    # (possibly double-buffered) resident table block.
    td = dp
    while td > 128 and 2 * vp * td * 4 > budget // 2:
        td -= 128
    td = max(td, 128)
    dp = _round_up(dp, td)  # re-pad so the D grid divides evenly

    def _need(tb_, td_):
        need = 2 * vp * td_ * 4           # table block (budget 2 bufs)
        need += 2 * tb_ * td_ * 4         # double-buffered output block
        need += 2 << 20                   # slack
        if use_onehot:
            need += tb_ * vp * 4          # one_hot temp
            need += 2 * tb_ * 4           # index block buffers
        return need

    # Token block tb: multiple of 8, as large as the budget allows, capped so
    # tiny inputs do not pay for a huge padded block.
    tb = max(8, min(block_tokens, _round_up(n, 8)))
    while tb > 8 and _need(tb, td) > budget:
        tb = max(8, _round_up(tb // 2, 8))

    n_pad = _round_up(n, tb)
    if n_pad != n:
        flat_idx = jnp.pad(flat_idx, (0, n_pad - n))

    # Pad the table to (vp, dp); padded rows/cols are zero and never selected
    # for real tokens (indices clamped to [0, V-1], columns sliced off below).
    tbl = table
    if (vp, dp) != (V, D):
        tbl = jnp.zeros((vp, dp), table.dtype).at[:V, :D].set(table)

    grid = (n_pad // tb, dp // td)
    vmem_limit = int(min(max(_need(tb, td), 1 << 20), budget + (4 << 20)))
    cparams = pltpu.CompilerParams(
        dimension_semantics=("parallel", "parallel"),
        vmem_limit_bytes=vmem_limit,
    )

    if use_onehot:
        idx2d = flat_idx.reshape(n_pad, 1)
        out = pl.pallas_call(
            _onehot_gather_kernel,
            out_shape=jax.ShapeDtypeStruct((n_pad, dp), table.dtype),
            grid_spec=pltpu.PrefetchScalarGridSpec(
                num_scalar_prefetch=0,
                grid=grid,
                in_specs=[
                    pl.BlockSpec((tb, 1), lambda i, j: (i, 0)),
                    pl.BlockSpec((vp, td), lambda i, j: (0, j)),
                ],
                out_specs=pl.BlockSpec((tb, td), lambda i, j: (i, j)),
            ),
            compiler_params=cparams,
        )(idx2d, tbl)
    else:
        out = pl.pallas_call(
            _row_gather_kernel,
            out_shape=jax.ShapeDtypeStruct((n_pad, dp), table.dtype),
            grid_spec=pltpu.PrefetchScalarGridSpec(
                num_scalar_prefetch=1,
                grid=grid,
                in_specs=[pl.BlockSpec((vp, td), lambda i, j, idx: (0, j))],
                out_specs=pl.BlockSpec((tb, td), lambda i, j, idx: (i, j)),
            ),
            compiler_params=cparams,
        )(flat_idx, tbl)

    out = out[:n, :D]
    return out.reshape(x.shape + (D,))


if __name__ == "__main__":
    vocab_size = 16
    model_dim = 32
    batch, seq = 2, 8

    table = build_position_encoding_table(vocab_size, model_dim)

    key = jax.random.PRNGKey(0)
    # Integer token / position indices, as PyTorch forward does x.long().
    x = jax.random.randint(key, (batch, seq), minval=0, maxval=vocab_size,
                           dtype=jnp.int32)

    out = jax.block_until_ready(position_encoding_lookup(table, x))

    # Reference check (plain JAX gather against the same frozen table).
    ref = jnp.take(table, x.reshape(-1), axis=0).reshape(batch, seq, model_dim)
    assert out.shape == (batch, seq, model_dim)
    assert out.dtype == jnp.float32
    assert bool(jnp.allclose(out, ref, atol=1e-6, rtol=1e-6))

    print("KERNEL_OK")
</pallas_src>

<mosaic_0001>
module attributes {stable_mosaic.version = 11 : i64} {
  func.func @_onehot_gather_kernel(%arg0: i32, %arg1: i32, %arg2: memref<16x1xi32, #tpu.memory_space<vmem>>, %arg3: memref<128x128xf32, #tpu.memory_space<vmem>>, %arg4: memref<16x128xf32, #tpu.memory_space<vmem>>) attributes {dimension_semantics = [#tpu.dimension_semantics<parallel>, #tpu.dimension_semantics<parallel>], iteration_bounds = array<i64: 1, 1>, scalar_prefetch = 0 : i64, scratch_operands = 0 : i64, tpu.core_type = #tpu.core_type<tc>, window_params = [{transform_indices = @transform_0, window_bounds = array<i64: 16, 1>}, {transform_indices = @transform_1, window_bounds = array<i64: 128, 128>}, {transform_indices = @transform_2, window_bounds = array<i64: 16, 128>}]} {
    %c0 = arith.constant 0 : index
    %c0_0 = arith.constant 0 : index
    %0 = vector.load %arg2[%c0, %c0_0] : memref<16x1xi32, #tpu.memory_space<vmem>>, vector<16x1xi32>
    %1 = tpu.iota {dimensions = array<i32: 1>} : vector<16x128xi32>
    %2 = vector.broadcast %0 : vector<16x1xi32> to vector<16x128xi32>
    %3 = arith.cmpi eq, %1, %2 : vector<16x128xi32>
    %4 = arith.extui %3 : vector<16x128xi1> to vector<16x128xi32>
    %5 = arith.sitofp %4 : vector<16x128xi32> to vector<16x128xf32>
    %c0_1 = arith.constant 0 : index
    %c0_2 = arith.constant 0 : index
    %6 = vector.load %arg3[%c0_1, %c0_2] : memref<128x128xf32, #tpu.memory_space<vmem>>, vector<128x128xf32>
    %cst = arith.constant dense<0.000000e+00> : vector<16x128xf32>
    %7 = tpu.matmul %5, %6, %cst {dimension_numbers = #tpu.dot_dimension_numbers<[1], [0], [0], [1], [0, 0, 1, 1], [], []>} : vector<16x128xf32>, vector<128x128xf32>, vector<16x128xf32> -> vector<16x128xf32>
    %c0_3 = arith.constant 0 : index
    %c0_4 = arith.constant 0 : index
    %8 = vector.load %arg4[%c0_3, %c0_4] : memref<16x128xf32, #tpu.memory_space<vmem>>, vector<16x128xf32>
    tpu.vector_store %arg4[%c0_3, %c0_4], %7 {strides = array<i32>} : memref<16x128xf32, #tpu.memory_space<vmem>>, vector<16x128xf32>,
    return
  }
  func.func @transform_0(%arg0: i32, %arg1: i32) -> (i32, i32) {
    %c0_i32 = arith.constant 0 : i32
    %c0_i32_0 = arith.constant 0 : i32
    return %arg0, %c0_i32 : i32, i32
  }
  func.func @transform_1(%arg0: i32, %arg1: i32) -> (i32, i32) {
    %c0_i32 = arith.constant 0 : i32
    %c0_i32_0 = arith.constant 0 : i32
    return %c0_i32, %arg1 : i32, i32
  }
  func.func @transform_2(%arg0: i32, %arg1: i32) -> (i32, i32) {
    %c0_i32 = arith.constant 0 : i32
    return %arg0, %arg1 : i32, i32
  }
}

</mosaic_0001>

<llo_original>
// kernel: tpu_custom_call.1
$region0: #{tpu_custom_call.1}
  #allocation0 [shape = 'u32[]', space=smem, size = 0x4, offset = 0x4, fixed_abs, tag = 'smem constant byte address 0x4 - core index']
  #allocation1 [shape = 'u32[144,128]{1,0:T(1,128)}', space=vmem, size = 0x12000, scoped, tag = 'internal scratch']
  %s0 = inlined_call_operand.vmem [shape: s32[16,1], index: 0, kind: input, shape index: {}]
  %s1 = inlined_call_operand.hbm [shape: f32[128,128], index: 1, kind: input, shape index: {}]
  %s2 = inlined_call_operand.hbm [shape: f32[16,128], index: 2, kind: output, shape index: {}]
  %s3 = sld [smem:[#allocation0]]
  $region22: #{tpu_custom_call.1} parent=0
    _
  %s5 = ssub.s32 1, %s3
  %s6 = scalar_select 0, %s5, %s3
  $region1: #{tpu_custom_call.1} parent=0
    #allocation2 [shape = 'u8[65536]{0}', space=vmem, size = 0x10000, scoped, tag = 'input window, operand 1, single buffered']
    #allocation3 [shape = 's32[1]{0}', space=sflag, size = 0x4, scoped, tag = 'scoped memory for tpu_custom_call.1']
    #allocation4 [shape = 's32[1]{0}', space=sflag, size = 0x4, scoped, tag = 'scoped memory for tpu_custom_call.1']
    #allocation5 [shape = 'u8[8192]{0}', space=vmem, size = 0x2000, scoped, tag = 'output window, operand 0, single buffered']
    %7 = vsyncpa [#allocation3], 0
    %8 = vsyncpa [#allocation4], 0
    // Predicated region
    $region2: #{tpu_custom_call.1} parent=1 // pred_check
      _
    $region3: #{tpu_custom_call.1} parent=1 // pred_check_branch
      %10 = sbr.rel (0) target = $region5
    $region4: #{tpu_custom_call.1} parent=1 // pred_region
      _
    $region5: #{tpu_custom_call.1} parent=1 // pred_fallthru
      _
    // Predicated region
    $region6: #{tpu_custom_call.1} parent=1 // pred_check
      _
    $region7: #{tpu_custom_call.1} parent=1 // pred_check_branch
      %12 = sbr.rel (0) target = $region9
    $region8: #{tpu_custom_call.1} parent=1 // pred_region
      %s14 = ssub.s32 2048, 2048
      %15 = vsyncadd [#allocation3], %s14
      %s16 = sshll.u32 [#allocation2], 4
      %s17 = int_to_ptr.vmem [resolvable:$true] %s16
      %22 = dma.hbm_to_vmem [thread:$0]  %s1, 2048, %s17, [#allocation3], 128, 128, 8
    $region9: #{tpu_custom_call.1} parent=1 // pred_fallthru
      _
    // Predicated region
    $region10: #{tpu_custom_call.1} parent=1 // pred_check
      _
    $region11: #{tpu_custom_call.1} parent=1 // pred_check_branch
      %24 = sbr.rel (0) target = $region13
    $region12: #{tpu_custom_call.1} parent=1 // pred_region
      %25 = dma.done [#allocation3], 2048
    $region13: #{tpu_custom_call.1} parent=1 // pred_fallthru
      _
    %v26 = vld [vmem:[%s0] sm:$0xff]
    %v27 = vld [vmem:[%s0 + $0x8] sm:$0xff]
    %v28 = vlaneseq
    %v29 = vand.u32 %v28, 127
    %30 = vset.pattern.permute.xlu0 0
    %31 = vperm.xlu0 %30, %v26
    %v32 = vpop.permute.xlu0 %31
    %33 = vset.pattern.permute.xlu0 0
    %34 = vperm.xlu0 %33, %v27
    %v35 = vpop.permute.xlu0 %34
    %vm36 = vcmp.eq.s32.totalorder %v29, %v32
    %vm37 = vcmp.eq.s32.totalorder %v29, %v35
    %v38 = vsel %vm36, 1, 0
    %v39 = vsel %vm37, 1, 0
    %v40 = vcvt.s32.f32 %v38
    %v41 = vcvt.s32.f32 %v39
    %v42 = vld [vmem:[#allocation2] sm:$0xff]
    %v43 = vld [vmem:[#allocation2 + $0x8] sm:$0xff]
    %v44 = vld [vmem:[#allocation2 + $0x10] sm:$0xff]
    %v45 = vld [vmem:[#allocation2 + $0x18] sm:$0xff]
    %v46 = vld [vmem:[#allocation2 + $0x20] sm:$0xff]
    %v47 = vld [vmem:[#allocation2 + $0x28] sm:$0xff]
    %v48 = vld [vmem:[#allocation2 + $0x30] sm:$0xff]
    %v49 = vld [vmem:[#allocation2 + $0x38] sm:$0xff]
    %v50 = vld [vmem:[#allocation2 + $0x40] sm:$0xff]
    %v51 = vld [vmem:[#allocation2 + $0x48] sm:$0xff]
    %v52 = vld [vmem:[#allocation2 + $0x50] sm:$0xff]
    %v53 = vld [vmem:[#allocation2 + $0x58] sm:$0xff]
    %v54 = vld [vmem:[#allocation2 + $0x60] sm:$0xff]
    %v55 = vld [vmem:[#allocation2 + $0x68] sm:$0xff]
    %v56 = vld [vmem:[#allocation2 + $0x70] sm:$0xff]
    %v57 = vld [vmem:[#allocation2 + $0x78] sm:$0xff]
    %58 = vmatprep.subr.mxu0 0.0
    %59 = vmatpush1.msra.mxu0 %v42
    %60 = vmatprep.subr.mxu0 0.0
    %61 = vmatpush1.msra.mxu0 %v43
    %62 = vmatprep.subr.mxu0 0.0
    %63 = vmatpush1.msra.mxu0 %v44
    %64 = vmatprep.subr.mxu0 0.0
    %65 = vmatpush1.msra.mxu0 %v45
    %66 = vmatprep.subr.mxu0 0.0
    %67 = vmatpush1.msra.mxu0 %v46
    %68 = vmatprep.subr.mxu0 0.0
    %69 = vmatpush1.msra.mxu0 %v47
    %70 = vmatprep.subr.mxu0 0.0
    %71 = vmatpush1.msra.mxu0 %v48
    %72 = vmatprep.subr.mxu0 0.0
    %73 = vmatpush1.msra.mxu0 %v49
    %74 = vmatprep.subr.mxu0 0.0
    %75 = vmatpush1.msra.mxu0 %v50
    %76 = vmatprep.subr.mxu0 0.0
    %77 = vmatpush1.msra.mxu0 %v51
    %78 = vmatprep.subr.mxu0 0.0
    %79 = vmatpush1.msra.mxu0 %v52
    %80 = vmatprep.subr.mxu0 0.0
    %81 = vmatpush1.msra.mxu0 %v53
    %82 = vmatprep.subr.mxu0 0.0
    %83 = vmatpush1.msra.mxu0 %v54
    %84 = vmatprep.subr.mxu0 0.0
    %85 = vmatpush1.msra.mxu0 %v55
    %86 = vmatprep.subr.mxu0 0.0
    %87 = vmatpush1.msra.mxu0 %v56
    %88 = vmatprep.subr.mxu0 0.0
    %89 = vmatpush1.msra.mxu0 %v57
    %90 = vmatprep.subr.mxu0 0.0
    %91 = vmatpush1.msra.mxu0 0.0
    %92 = vmatprep.subr.mxu0 0.0
    %93 = vmatpush1.msra.mxu0 0.0
    %94 = vmatprep.subr.mxu0 0.0
    %95 = vmatpush1.msra.mxu0 0.0
    %96 = vmatprep.subr.mxu0 0.0
    %97 = vmatpush1.msra.mxu0 0.0
    %98 = vmatprep.subr.mxu0 0.0
    %99 = vmatpush1.msra.mxu0 0.0
    %100 = vmatprep.subr.mxu0 0.0
    %101 = vmatpush1.msra.mxu0 0.0
    %102 = vmatprep.subr.mxu0 0.0
    %103 = vmatpush1.msra.mxu0 0.0
    %104 = vmatprep.subr.mxu0 0.0
    %105 = vmatpush1.msra.mxu0 0.0
    %106 = vmatprep.subr.mxu0 0.0
    %107 = vmatpush1.msra.mxu0 0.0
    %108 = vmatprep.subr.mxu0 0.0
    %109 = vmatpush1.msra.mxu0 0.0
    %110 = vmatprep.subr.mxu0 0.0
    %111 = vmatpush1.msra.mxu0 0.0
    %112 = vmatprep.subr.mxu0 0.0
    %113 = vmatpush1.msra.mxu0 0.0
    %114 = vmatprep.subr.mxu0 0.0
    %115 = vmatpush1.msra.mxu0 0.0
    %116 = vmatprep.subr.mxu0 0.0
    %117 = vmatpush1.msra.mxu0 0.0
    %118 = vmatprep.subr.mxu0 0.0
    %119 = vmatpush1.msra.mxu0 0.0
    %120 = vmatprep.subr.mxu0 0.0
    %121 = vmatpush1.msra.mxu0 0.0
    %122 = vmatprep.mubr.f32.mxu0 0.0
    %123 = vmatmul.mubr.f32.gmra.mrb[0].mxu0 %v40
    %v124 = vpop.f32.mrb[0].mxu0
    %v125 = vadd.f32 0.0, %v124
    %v126 = vpop.f32.mrb[0].mxu0
    %127 = vmatprep.mubr.f32.mxu0 0.0
    %128 = vmatmul.mubr.f32.gmra.mrb[0].mxu0 %v41
    %v129 = vpop.f32.mrb[0].mxu0
    %v130 = vadd.f32 0.0, %v129
    %v131 = vpop.f32.mrb[0].mxu0
    %132 = vdwg.mxu0
    %133 = vst [vmem:[#allocation5] sm:$0xff] %v125
    %134 = vst [vmem:[#allocation5 + $0x8] sm:$0xff] %v130
    // Predicated region
    $region14: #{tpu_custom_call.1} parent=1 // pred_check
      _
    $region15: #{tpu_custom_call.1} parent=1 // pred_check_branch
      %136 = sbr.rel (0) target = $region17
    $region16: #{tpu_custom_call.1} parent=1 // pred_region
      %s138 = ssub.s32 256, 256
      %139 = vsyncadd [#allocation4], %s138
      %s140 = sshll.u32 [#allocation5], 4
      %s141 = int_to_ptr.vmem [resolvable:$true] %s140
      %146 = dma.vmem_to_hbm [thread:$0]  %s141, 256, %s2, [#allocation4], 128, 128, 8
    $region17: #{tpu_custom_call.1} parent=1 // pred_fallthru
      _
    // Predicated region
    $region18: #{tpu_custom_call.1} parent=1 // pred_check
      _
    $region19: #{tpu_custom_call.1} parent=1 // pred_check_branch
      %148 = sbr.rel (0) target = $region21
    $region20: #{tpu_custom_call.1} parent=1 // pred_region
      %149 = dma.done [#allocation4], 256
    $region21: #{tpu_custom_call.1} parent=1 // pred_fallthru
      _
    %150 = vsyncpa [#allocation3], 1
    %151 = vsyncpa [#allocation4], 1

</llo_original>
